<compile_context>
chip_gen: v7x
topology: tpu7x:2x2x1
jax: 0.10.0
libtpu: 0.0.40
codegen_flags: <defaults>
</compile_context>

<pallas_src>
import functools

import jax
import jax.numpy as jnp
from jax.experimental import pallas as pl
from jax.experimental.pallas import tpu as pltpu

_LANES = 128
_INV_SQRT2 = 0.7071067811865476   # 1/sqrt(2)
_LOW_BOUND = 1e-6                 # Low_bound forward clamp
_SCALE_MIN = 1e-9                 # scale clamp

# Abramowitz & Stegun 7.1.26 erf coefficients (max abs error 1.5e-7).
_ERF_P = 0.3275911
_ERF_A1 = 0.254829592
_ERF_A2 = -0.284496736
_ERF_A3 = 1.421413741
_ERF_A4 = -1.453152027
_ERF_A5 = 1.061405429


def _erf_f32(z):
    """f32-accurate erf via A&S 7.1.26; only uses mul/add/div/exp/select."""
    az = jnp.abs(z)
    t = 1.0 / (1.0 + _ERF_P * az)
    poly = t * (_ERF_A1 + t * (_ERF_A2 + t * (_ERF_A3 + t * (_ERF_A4 + t * _ERF_A5))))
    r = poly * jnp.exp(-(az * az))              # = 1 - erf(|z|)
    return jnp.where(z < 0.0, r - 1.0, 1.0 - r)


def _gmix3_kernel(x_ref, m1_ref, m2_ref, m3_ref,
                  s1_ref, s2_ref, s3_ref,
                  p1_ref, p2_ref, p3_ref,
                  o_ref, *, half_q, return_lkl):
    x = x_ref[...].astype(jnp.float32)
    x_hi = x + half_q
    x_lo = x - half_q

    def weighted_component(p_ref, m_ref, s_ref):
        m = m_ref[...].astype(jnp.float32)
        s = jnp.maximum(s_ref[...].astype(jnp.float32), _SCALE_MIN)
        inv = _INV_SQRT2 / s
        d = _erf_f32((x_hi - m) * inv) - _erf_f32((x_lo - m) * inv)
        return p_ref[...].astype(jnp.float32) * jnp.abs(d)

    # Accumulate components sequentially (keeps fewer block-sized temps live).
    acc = weighted_component(p1_ref, m1_ref, s1_ref)
    acc = acc + weighted_component(p2_ref, m2_ref, s2_ref)
    acc = acc + weighted_component(p3_ref, m3_ref, s3_ref)
    lkl = jnp.maximum(0.5 * acc, _LOW_BOUND)     # 0.5 hoisted out of the cdf diff

    if return_lkl:
        o_ref[...] = lkl.astype(o_ref.dtype)
    else:
        o_ref[...] = (-jnp.log2(lkl)).astype(o_ref.dtype)


def _gmix3_jnp(x, m1, m2, m3, s1, s2, s3, p1, p2, p3, Q=1.0, return_lkl=False):
    """PyTorch-faithful plain-jnp formulation (used for ragged tails + tests)."""
    half_q = 0.5 * Q

    def cdf(v, m, s):
        return 0.5 * (1.0 + jax.lax.erf((v - m) * (_INV_SQRT2 / s)))

    s1 = jnp.maximum(s1, _SCALE_MIN)
    s2 = jnp.maximum(s2, _SCALE_MIN)
    s3 = jnp.maximum(s3, _SCALE_MIN)
    l1 = jnp.abs(cdf(x + half_q, m1, s1) - cdf(x - half_q, m1, s1))
    l2 = jnp.abs(cdf(x + half_q, m2, s2) - cdf(x - half_q, m2, s2))
    l3 = jnp.abs(cdf(x + half_q, m3, s3) - cdf(x - half_q, m3, s3))
    lkl = jnp.maximum(p1 * l1 + p2 * l2 + p3 * l3, _LOW_BOUND)
    return lkl if return_lkl else -jnp.log2(lkl)


def entropy_gaussian_mix_prob_3(x, mean1, mean2, mean3,
                                scale1, scale2, scale3,
                                probs1, probs2, probs3,
                                Q=1.0, return_lkl=False, *,
                                tile_rows=2048):
    """Bits (or likelihood) of a 3-component Gaussian-mixture entropy model.

    All ten inputs share x's shape (any rank).  Returns an array of the same
    shape/dtype as x.
    """
    inputs = (x, mean1, mean2, mean3, scale1, scale2, scale3,
              probs1, probs2, probs3)
    for a in inputs[1:]:
        assert a.shape == x.shape, "all inputs must share x's shape"

    orig_shape = x.shape
    out_dtype = x.dtype
    n = x.size
    half_q = float(0.5 * Q)

    flats = [jnp.ravel(a) for a in inputs]
    n_main = (n // _LANES) * _LANES     # lane-aligned prefix handled by the kernel

    pieces = []
    if n_main:
        rows = n_main // _LANES
        slabs = [f[:n_main].reshape(rows, _LANES) for f in flats]

        if rows <= tile_rows:
            if rows >= 16:
                # Two 8-aligned blocks so v7x's two TensorCores both get work.
                tr = 8 * pl.cdiv(rows, 16)
            else:
                tr = rows                       # full extent (always legal)
        else:
            tr = tile_rows                      # multiple of 8; ragged last block ok
        grid = (pl.cdiv(rows, tr),)

        blk = pl.BlockSpec((tr, _LANES), lambda i: (i, 0))
        kernel = functools.partial(_gmix3_kernel, half_q=half_q,
                                   return_lkl=bool(return_lkl))

        main = pl.pallas_call(
            kernel,
            out_shape=jax.ShapeDtypeStruct((rows, _LANES), out_dtype),
            grid_spec=pltpu.PrefetchScalarGridSpec(
                num_scalar_prefetch=0,
                grid=grid,
                in_specs=[blk] * len(slabs),
                out_specs=blk,
            ),
            compiler_params=pltpu.CompilerParams(
                dimension_semantics=("parallel",),
                # 22 MiB of double-buffered blocks + ~10 MiB of block-sized
                # temporaries at tile_rows=2048; 48 MiB < v7x's 64 MiB physical.
                vmem_limit_bytes=48 * 1024 * 1024,
            ),
        )(*slabs)
        pieces.append(main.reshape(-1))

    if n_main < n:
        # <128-element tail: plain jnp instead of padding all 10 inputs.
        tail = [f[n_main:] for f in flats]
        pieces.append(_gmix3_jnp(*tail, Q=Q, return_lkl=return_lkl).astype(out_dtype))

    out = pieces[0] if len(pieces) == 1 else jnp.concatenate(pieces)
    return out.reshape(orig_shape)


# ----------------------------------------------------------------------------
# Test harness
# ----------------------------------------------------------------------------
def _make_inputs(key, shape):
    ks = jax.random.split(key, 8)
    x = jax.random.normal(ks[0], shape, jnp.float32) * 2.0
    m1 = jax.random.normal(ks[1], shape, jnp.float32)
    m2 = jax.random.normal(ks[2], shape, jnp.float32)
    m3 = jax.random.normal(ks[3], shape, jnp.float32)
    s1 = jax.nn.softplus(jax.random.normal(ks[4], shape, jnp.float32))
    s2 = jax.nn.softplus(jax.random.normal(ks[5], shape, jnp.float32))
    s3 = jax.nn.softplus(jax.random.normal(ks[6], shape, jnp.float32))
    probs = jax.nn.softmax(jax.random.normal(ks[7], shape + (3,), jnp.float32), axis=-1)
    return (x, m1, m2, m3, s1, s2, s3, probs[..., 0], probs[..., 1], probs[..., 2])


def _check(args, Q):
    ref_lkl = _gmix3_jnp(*args, Q=Q, return_lkl=True)
    ref_bits = -jnp.log2(ref_lkl)

    bits = jax.block_until_ready(entropy_gaussian_mix_prob_3(*args, Q=Q))
    assert bits.shape == args[0].shape

    # Likelihood-domain check: numerically well-posed everywhere (the -log2
    # amplifies any erf-approximation difference near the 1e-6 clamp).
    assert jnp.allclose(jnp.exp2(-bits), ref_lkl, atol=2e-6, rtol=2e-3), \
        "bits mismatch vs reference (likelihood domain)"
    # Raw-bits check away from the clamp, where log2 amplification is bounded.
    mask = ref_lkl > 1e-3
    err = jnp.where(mask, jnp.abs(bits - ref_bits), 0.0)
    assert jnp.max(err) < 5e-3, "bits mismatch vs reference (away from clamp)"

    lkl = jax.block_until_ready(
        entropy_gaussian_mix_prob_3(*args, Q=Q, return_lkl=True))
    assert jnp.allclose(lkl, ref_lkl, atol=2e-6, rtol=1e-3), "lkl mismatch vs reference"


if __name__ == "__main__":
    key = jax.random.PRNGKey(0)
    k0, k1 = jax.random.split(key, 2)

    # Lane-aligned case (2048 elems -> 16 rows -> 2 blocks of 8 rows).
    _check(_make_inputs(k0, (2, 4, 16, 16)), Q=1.0)

    # Non-lane-aligned case (1155 elems -> 9-row kernel slab + 3-element jnp tail),
    # also exercises a non-default Q.
    _check(_make_inputs(k1, (3, 5, 7, 11)), Q=0.5)

    print("KERNEL_OK")
</pallas_src>

<mosaic_0001>
module attributes {stable_mosaic.version = 11 : i64} {
  func.func @_gmix3_kernel(%arg0: i32, %arg1: memref<8x128xf32, #tpu.memory_space<vmem>>, %arg2: memref<8x128xf32, #tpu.memory_space<vmem>>, %arg3: memref<8x128xf32, #tpu.memory_space<vmem>>, %arg4: memref<8x128xf32, #tpu.memory_space<vmem>>, %arg5: memref<8x128xf32, #tpu.memory_space<vmem>>, %arg6: memref<8x128xf32, #tpu.memory_space<vmem>>, %arg7: memref<8x128xf32, #tpu.memory_space<vmem>>, %arg8: memref<8x128xf32, #tpu.memory_space<vmem>>, %arg9: memref<8x128xf32, #tpu.memory_space<vmem>>, %arg10: memref<8x128xf32, #tpu.memory_space<vmem>>, %arg11: memref<8x128xf32, #tpu.memory_space<vmem>>) attributes {dimension_semantics = [#tpu.dimension_semantics<parallel>], iteration_bounds = array<i64: 2>, scalar_prefetch = 0 : i64, scratch_operands = 0 : i64, tpu.core_type = #tpu.core_type<tc>, window_params = [{transform_indices = @transform_0, window_bounds = array<i64: 8, 128>}, {transform_indices = @transform_1, window_bounds = array<i64: 8, 128>}, {transform_indices = @transform_2, window_bounds = array<i64: 8, 128>}, {transform_indices = @transform_3, window_bounds = array<i64: 8, 128>}, {transform_indices = @transform_4, window_bounds = array<i64: 8, 128>}, {transform_indices = @transform_5, window_bounds = array<i64: 8, 128>}, {transform_indices = @transform_6, window_bounds = array<i64: 8, 128>}, {transform_indices = @transform_7, window_bounds = array<i64: 8, 128>}, {transform_indices = @transform_8, window_bounds = array<i64: 8, 128>}, {transform_indices = @transform_9, window_bounds = array<i64: 8, 128>}, {transform_indices = @transform_10, window_bounds = array<i64: 8, 128>}]} {
    %c0 = arith.constant 0 : index
    %c0_0 = arith.constant 0 : index
    %0 = vector.load %arg1[%c0, %c0_0] : memref<8x128xf32, #tpu.memory_space<vmem>>, vector<8x128xf32>
    %cst = arith.constant 5.000000e-01 : f32
    %1 = vector.broadcast %cst : f32 to vector<8x128xf32>
    %2 = arith.addf %0, %1 : vector<8x128xf32>
    %cst_1 = arith.constant 5.000000e-01 : f32
    %3 = vector.broadcast %cst_1 : f32 to vector<8x128xf32>
    %4 = arith.subf %0, %3 : vector<8x128xf32>
    %c0_2 = arith.constant 0 : index
    %c0_3 = arith.constant 0 : index
    %5 = vector.load %arg2[%c0_2, %c0_3] : memref<8x128xf32, #tpu.memory_space<vmem>>, vector<8x128xf32>
    %c0_4 = arith.constant 0 : index
    %c0_5 = arith.constant 0 : index
    %6 = vector.load %arg5[%c0_4, %c0_5] : memref<8x128xf32, #tpu.memory_space<vmem>>, vector<8x128xf32>
    %cst_6 = arith.constant 9.99999971E-10 : f32
    %7 = vector.broadcast %cst_6 : f32 to vector<8x128xf32>
    %8 = arith.maximumf %6, %7 : vector<8x128xf32>
    %cst_7 = arith.constant 0.707106769 : f32
    %9 = vector.broadcast %cst_7 : f32 to vector<8x128xf32>
    %10 = arith.divf %9, %8 : vector<8x128xf32>
    %11 = arith.subf %2, %5 : vector<8x128xf32>
    %12 = arith.mulf %11, %10 : vector<8x128xf32>
    %13 = math.absf %12 : vector<8x128xf32>
    %cst_8 = arith.constant 0.327591091 : f32
    %14 = vector.broadcast %cst_8 : f32 to vector<8x128xf32>
    %15 = arith.mulf %14, %13 : vector<8x128xf32>
    %cst_9 = arith.constant 1.000000e+00 : f32
    %16 = vector.broadcast %cst_9 : f32 to vector<8x128xf32>
    %17 = arith.addf %16, %15 : vector<8x128xf32>
    %cst_10 = arith.constant 1.000000e+00 : f32
    %18 = vector.broadcast %cst_10 : f32 to vector<8x128xf32>
    %19 = arith.divf %18, %17 : vector<8x128xf32>
    %cst_11 = arith.constant 1.06140542 : f32
    %20 = vector.broadcast %cst_11 : f32 to vector<8x128xf32>
    %21 = arith.mulf %19, %20 : vector<8x128xf32>
    %cst_12 = arith.constant -1.45315206 : f32
    %22 = vector.broadcast %cst_12 : f32 to vector<8x128xf32>
    %23 = arith.addf %22, %21 : vector<8x128xf32>
    %24 = arith.mulf %19, %23 : vector<8x128xf32>
    %cst_13 = arith.constant 1.42141378 : f32
    %25 = vector.broadcast %cst_13 : f32 to vector<8x128xf32>
    %26 = arith.addf %25, %24 : vector<8x128xf32>
    %27 = arith.mulf %19, %26 : vector<8x128xf32>
    %cst_14 = arith.constant -0.284496725 : f32
    %28 = vector.broadcast %cst_14 : f32 to vector<8x128xf32>
    %29 = arith.addf %28, %27 : vector<8x128xf32>
    %30 = arith.mulf %19, %29 : vector<8x128xf32>
    %cst_15 = arith.constant 0.254829586 : f32
    %31 = vector.broadcast %cst_15 : f32 to vector<8x128xf32>
    %32 = arith.addf %31, %30 : vector<8x128xf32>
    %33 = arith.mulf %19, %32 : vector<8x128xf32>
    %34 = arith.mulf %13, %13 : vector<8x128xf32>
    %cst_16 = arith.constant 0.000000e+00 : f32
    %35 = vector.broadcast %cst_16 : f32 to vector<8x128xf32>
    %36 = arith.subf %35, %34 : vector<8x128xf32>
    %37 = math.exp %36 : vector<8x128xf32>
    %38 = arith.mulf %33, %37 : vector<8x128xf32>
    %cst_17 = arith.constant 0.000000e+00 : f32
    %39 = vector.broadcast %cst_17 : f32 to vector<8x128xf32>
    %40 = arith.cmpf olt, %12, %39 : vector<8x128xf32>
    %cst_18 = arith.constant 1.000000e+00 : f32
    %41 = vector.broadcast %cst_18 : f32 to vector<8x128xf32>
    %42 = arith.subf %38, %41 : vector<8x128xf32>
    %cst_19 = arith.constant 1.000000e+00 : f32
    %43 = vector.broadcast %cst_19 : f32 to vector<8x128xf32>
    %44 = arith.subf %43, %38 : vector<8x128xf32>
    %45 = arith.select %40, %42, %44 : vector<8x128xi1>, vector<8x128xf32>
    %46 = arith.subf %4, %5 : vector<8x128xf32>
    %47 = arith.mulf %46, %10 : vector<8x128xf32>
    %48 = math.absf %47 : vector<8x128xf32>
    %cst_20 = arith.constant 0.327591091 : f32
    %49 = vector.broadcast %cst_20 : f32 to vector<8x128xf32>
    %50 = arith.mulf %49, %48 : vector<8x128xf32>
    %cst_21 = arith.constant 1.000000e+00 : f32
    %51 = vector.broadcast %cst_21 : f32 to vector<8x128xf32>
    %52 = arith.addf %51, %50 : vector<8x128xf32>
    %cst_22 = arith.constant 1.000000e+00 : f32
    %53 = vector.broadcast %cst_22 : f32 to vector<8x128xf32>
    %54 = arith.divf %53, %52 : vector<8x128xf32>
    %cst_23 = arith.constant 1.06140542 : f32
    %55 = vector.broadcast %cst_23 : f32 to vector<8x128xf32>
    %56 = arith.mulf %54, %55 : vector<8x128xf32>
    %cst_24 = arith.constant -1.45315206 : f32
    %57 = vector.broadcast %cst_24 : f32 to vector<8x128xf32>
    %58 = arith.addf %57, %56 : vector<8x128xf32>
    %59 = arith.mulf %54, %58 : vector<8x128xf32>
    %cst_25 = arith.constant 1.42141378 : f32
    %60 = vector.broadcast %cst_25 : f32 to vector<8x128xf32>
    %61 = arith.addf %60, %59 : vector<8x128xf32>
    %62 = arith.mulf %54, %61 : vector<8x128xf32>
    %cst_26 = arith.constant -0.284496725 : f32
    %63 = vector.broadcast %cst_26 : f32 to vector<8x128xf32>
    %64 = arith.addf %63, %62 : vector<8x128xf32>
    %65 = arith.mulf %54, %64 : vector<8x128xf32>
    %cst_27 = arith.constant 0.254829586 : f32
    %66 = vector.broadcast %cst_27 : f32 to vector<8x128xf32>
    %67 = arith.addf %66, %65 : vector<8x128xf32>
    %68 = arith.mulf %54, %67 : vector<8x128xf32>
    %69 = arith.mulf %48, %48 : vector<8x128xf32>
    %cst_28 = arith.constant 0.000000e+00 : f32
    %70 = vector.broadcast %cst_28 : f32 to vector<8x128xf32>
    %71 = arith.subf %70, %69 : vector<8x128xf32>
    %72 = math.exp %71 : vector<8x128xf32>
    %73 = arith.mulf %68, %72 : vector<8x128xf32>
    %cst_29 = arith.constant 0.000000e+00 : f32
    %74 = vector.broadcast %cst_29 : f32 to vector<8x128xf32>
    %75 = arith.cmpf olt, %47, %74 : vector<8x128xf32>
    %cst_30 = arith.constant 1.000000e+00 : f32
    %76 = vector.broadcast %cst_30 : f32 to vector<8x128xf32>
    %77 = arith.subf %73, %76 : vector<8x128xf32>
    %cst_31 = arith.constant 1.000000e+00 : f32
    %78 = vector.broadcast %cst_31 : f32 to vector<8x128xf32>
    %79 = arith.subf %78, %73 : vector<8x128xf32>
    %80 = arith.select %75, %77, %79 : vector<8x128xi1>, vector<8x128xf32>
    %81 = arith.subf %45, %80 : vector<8x128xf32>
    %c0_32 = arith.constant 0 : index
    %c0_33 = arith.constant 0 : index
    %82 = vector.load %arg8[%c0_32, %c0_33] : memref<8x128xf32, #tpu.memory_space<vmem>>, vector<8x128xf32>
    %83 = math.absf %81 : vector<8x128xf32>
    %84 = arith.mulf %82, %83 : vector<8x128xf32>
    %c0_34 = arith.constant 0 : index
    %c0_35 = arith.constant 0 : index
    %85 = vector.load %arg3[%c0_34, %c0_35] : memref<8x128xf32, #tpu.memory_space<vmem>>, vector<8x128xf32>
    %c0_36 = arith.constant 0 : index
    %c0_37 = arith.constant 0 : index
    %86 = vector.load %arg6[%c0_36, %c0_37] : memref<8x128xf32, #tpu.memory_space<vmem>>, vector<8x128xf32>
    %cst_38 = arith.constant 9.99999971E-10 : f32
    %87 = vector.broadcast %cst_38 : f32 to vector<8x128xf32>
    %88 = arith.maximumf %86, %87 : vector<8x128xf32>
    %cst_39 = arith.constant 0.707106769 : f32
    %89 = vector.broadcast %cst_39 : f32 to vector<8x128xf32>
    %90 = arith.divf %89, %88 : vector<8x128xf32>
    %91 = arith.subf %2, %85 : vector<8x128xf32>
    %92 = arith.mulf %91, %90 : vector<8x128xf32>
    %93 = math.absf %92 : vector<8x128xf32>
    %cst_40 = arith.constant 0.327591091 : f32
    %94 = vector.broadcast %cst_40 : f32 to vector<8x128xf32>
    %95 = arith.mulf %94, %93 : vector<8x128xf32>
    %cst_41 = arith.constant 1.000000e+00 : f32
    %96 = vector.broadcast %cst_41 : f32 to vector<8x128xf32>
    %97 = arith.addf %96, %95 : vector<8x128xf32>
    %cst_42 = arith.constant 1.000000e+00 : f32
    %98 = vector.broadcast %cst_42 : f32 to vector<8x128xf32>
    %99 = arith.divf %98, %97 : vector<8x128xf32>
    %cst_43 = arith.constant 1.06140542 : f32
    %100 = vector.broadcast %cst_43 : f32 to vector<8x128xf32>
    %101 = arith.mulf %99, %100 : vector<8x128xf32>
    %cst_44 = arith.constant -1.45315206 : f32
    %102 = vector.broadcast %cst_44 : f32 to vector<8x128xf32>
    %103 = arith.addf %102, %101 : vector<8x128xf32>
    %104 = arith.mulf %99, %103 : vector<8x128xf32>
    %cst_45 = arith.constant 1.42141378 : f32
    %105 = vector.broadcast %cst_45 : f32 to vector<8x128xf32>
    %106 = arith.addf %105, %104 : vector<8x128xf32>
    %107 = arith.mulf %99, %106 : vector<8x128xf32>
    %cst_46 = arith.constant -0.284496725 : f32
    %108 = vector.broadcast %cst_46 : f32 to vector<8x128xf32>
    %109 = arith.addf %108, %107 : vector<8x128xf32>
    %110 = arith.mulf %99, %109 : vector<8x128xf32>
    %cst_47 = arith.constant 0.254829586 : f32
    %111 = vector.broadcast %cst_47 : f32 to vector<8x128xf32>
    %112 = arith.addf %111, %110 : vector<8x128xf32>
    %113 = arith.mulf %99, %112 : vector<8x128xf32>
    %114 = arith.mulf %93, %93 : vector<8x128xf32>
    %cst_48 = arith.constant 0.000000e+00 : f32
    %115 = vector.broadcast %cst_48 : f32 to vector<8x128xf32>
    %116 = arith.subf %115, %114 : vector<8x128xf32>
    %117 = math.exp %116 : vector<8x128xf32>
    %118 = arith.mulf %113, %117 : vector<8x128xf32>
    %cst_49 = arith.constant 0.000000e+00 : f32
    %119 = vector.broadcast %cst_49 : f32 to vector<8x128xf32>
    %120 = arith.cmpf olt, %92, %119 : vector<8x128xf32>
    %cst_50 = arith.constant 1.000000e+00 : f32
    %121 = vector.broadcast %cst_50 : f32 to vector<8x128xf32>
    %122 = arith.subf %118, %121 : vector<8x128xf32>
    %cst_51 = arith.constant 1.000000e+00 : f32
    %123 = vector.broadcast %cst_51 : f32 to vector<8x128xf32>
    %124 = arith.subf %123, %118 : vector<8x128xf32>
    %125 = arith.select %120, %122, %124 : vector<8x128xi1>, vector<8x128xf32>
    %126 = arith.subf %4, %85 : vector<8x128xf32>
    %127 = arith.mulf %126, %90 : vector<8x128xf32>
    %128 = math.absf %127 : vector<8x128xf32>
    %cst_52 = arith.constant 0.327591091 : f32
    %129 = vector.broadcast %cst_52 : f32 to vector<8x128xf32>
    %130 = arith.mulf %129, %128 : vector<8x128xf32>
    %cst_53 = arith.constant 1.000000e+00 : f32
    %131 = vector.broadcast %cst_53 : f32 to vector<8x128xf32>
    %132 = arith.addf %131, %130 : vector<8x128xf32>
    %cst_54 = arith.constant 1.000000e+00 : f32
    %133 = vector.broadcast %cst_54 : f32 to vector<8x128xf32>
    %134 = arith.divf %133, %132 : vector<8x128xf32>
    %cst_55 = arith.constant 1.06140542 : f32
    %135 = vector.broadcast %cst_55 : f32 to vector<8x128xf32>
    %136 = arith.mulf %134, %135 : vector<8x128xf32>
    %cst_56 = arith.constant -1.45315206 : f32
    %137 = vector.broadcast %cst_56 : f32 to vector<8x128xf32>
    %138 = arith.addf %137, %136 : vector<8x128xf32>
    %139 = arith.mulf %134, %138 : vector<8x128xf32>
    %cst_57 = arith.constant 1.42141378 : f32
    %140 = vector.broadcast %cst_57 : f32 to vector<8x128xf32>
    %141 = arith.addf %140, %139 : vector<8x128xf32>
    %142 = arith.mulf %134, %141 : vector<8x128xf32>
    %cst_58 = arith.constant -0.284496725 : f32
    %143 = vector.broadcast %cst_58 : f32 to vector<8x128xf32>
    %144 = arith.addf %143, %142 : vector<8x128xf32>
    %145 = arith.mulf %134, %144 : vector<8x128xf32>
    %cst_59 = arith.constant 0.254829586 : f32
    %146 = vector.broadcast %cst_59 : f32 to vector<8x128xf32>
    %147 = arith.addf %146, %145 : vector<8x128xf32>
    %148 = arith.mulf %134, %147 : vector<8x128xf32>
    %149 = arith.mulf %128, %128 : vector<8x128xf32>
    %cst_60 = arith.constant 0.000000e+00 : f32
    %150 = vector.broadcast %cst_60 : f32 to vector<8x128xf32>
    %151 = arith.subf %150, %149 : vector<8x128xf32>
    %152 = math.exp %151 : vector<8x128xf32>
    %153 = arith.mulf %148, %152 : vector<8x128xf32>
    %cst_61 = arith.constant 0.000000e+00 : f32
    %154 = vector.broadcast %cst_61 : f32 to vector<8x128xf32>
    %155 = arith.cmpf olt, %127, %154 : vector<8x128xf32>
    %cst_62 = arith.constant 1.000000e+00 : f32
    %156 = vector.broadcast %cst_62 : f32 to vector<8x128xf32>
    %157 = arith.subf %153, %156 : vector<8x128xf32>
    %cst_63 = arith.constant 1.000000e+00 : f32
    %158 = vector.broadcast %cst_63 : f32 to vector<8x128xf32>
    %159 = arith.subf %158, %153 : vector<8x128xf32>
    %160 = arith.select %155, %157, %159 : vector<8x128xi1>, vector<8x128xf32>
    %161 = arith.subf %125, %160 : vector<8x128xf32>
    %c0_64 = arith.constant 0 : index
    %c0_65 = arith.constant 0 : index
    %162 = vector.load %arg9[%c0_64, %c0_65] : memref<8x128xf32, #tpu.memory_space<vmem>>, vector<8x128xf32>
    %163 = math.absf %161 : vector<8x128xf32>
    %164 = arith.mulf %162, %163 : vector<8x128xf32>
    %165 = arith.addf %84, %164 : vector<8x128xf32>
    %c0_66 = arith.constant 0 : index
    %c0_67 = arith.constant 0 : index
    %166 = vector.load %arg4[%c0_66, %c0_67] : memref<8x128xf32, #tpu.memory_space<vmem>>, vector<8x128xf32>
    %c0_68 = arith.constant 0 : index
    %c0_69 = arith.constant 0 : index
    %167 = vector.load %arg7[%c0_68, %c0_69] : memref<8x128xf32, #tpu.memory_space<vmem>>, vector<8x128xf32>
    %cst_70 = arith.constant 9.99999971E-10 : f32
    %168 = vector.broadcast %cst_70 : f32 to vector<8x128xf32>
    %169 = arith.maximumf %167, %168 : vector<8x128xf32>
    %cst_71 = arith.constant 0.707106769 : f32
    %170 = vector.broadcast %cst_71 : f32 to vector<8x128xf32>
    %171 = arith.divf %170, %169 : vector<8x128xf32>
    %172 = arith.subf %2, %166 : vector<8x128xf32>
    %173 = arith.mulf %172, %171 : vector<8x128xf32>
    %174 = math.absf %173 : vector<8x128xf32>
    %cst_72 = arith.constant 0.327591091 : f32
    %175 = vector.broadcast %cst_72 : f32 to vector<8x128xf32>
    %176 = arith.mulf %175, %174 : vector<8x128xf32>
    %cst_73 = arith.constant 1.000000e+00 : f32
    %177 = vector.broadcast %cst_73 : f32 to vector<8x128xf32>
    %178 = arith.addf %177, %176 : vector<8x128xf32>
    %cst_74 = arith.constant 1.000000e+00 : f32
    %179 = vector.broadcast %cst_74 : f32 to vector<8x128xf32>
    %180 = arith.divf %179, %178 : vector<8x128xf32>
    %cst_75 = arith.constant 1.06140542 : f32
    %181 = vector.broadcast %cst_75 : f32 to vector<8x128xf32>
    %182 = arith.mulf %180, %181 : vector<8x128xf32>
    %cst_76 = arith.constant -1.45315206 : f32
    %183 = vector.broadcast %cst_76 : f32 to vector<8x128xf32>
    %184 = arith.addf %183, %182 : vector<8x128xf32>
    %185 = arith.mulf %180, %184 : vector<8x128xf32>
    %cst_77 = arith.constant 1.42141378 : f32
    %186 = vector.broadcast %cst_77 : f32 to vector<8x128xf32>
    %187 = arith.addf %186, %185 : vector<8x128xf32>
    %188 = arith.mulf %180, %187 : vector<8x128xf32>
    %cst_78 = arith.constant -0.284496725 : f32
    %189 = vector.broadcast %cst_78 : f32 to vector<8x128xf32>
    %190 = arith.addf %189, %188 : vector<8x128xf32>
    %191 = arith.mulf %180, %190 : vector<8x128xf32>
    %cst_79 = arith.constant 0.254829586 : f32
    %192 = vector.broadcast %cst_79 : f32 to vector<8x128xf32>
    %193 = arith.addf %192, %191 : vector<8x128xf32>
    %194 = arith.mulf %180, %193 : vector<8x128xf32>
    %195 = arith.mulf %174, %174 : vector<8x128xf32>
    %cst_80 = arith.constant 0.000000e+00 : f32
    %196 = vector.broadcast %cst_80 : f32 to vector<8x128xf32>
    %197 = arith.subf %196, %195 : vector<8x128xf32>
    %198 = math.exp %197 : vector<8x128xf32>
    %199 = arith.mulf %194, %198 : vector<8x128xf32>
    %cst_81 = arith.constant 0.000000e+00 : f32
    %200 = vector.broadcast %cst_81 : f32 to vector<8x128xf32>
    %201 = arith.cmpf olt, %173, %200 : vector<8x128xf32>
    %cst_82 = arith.constant 1.000000e+00 : f32
    %202 = vector.broadcast %cst_82 : f32 to vector<8x128xf32>
    %203 = arith.subf %199, %202 : vector<8x128xf32>
    %cst_83 = arith.constant 1.000000e+00 : f32
    %204 = vector.broadcast %cst_83 : f32 to vector<8x128xf32>
    %205 = arith.subf %204, %199 : vector<8x128xf32>
    %206 = arith.select %201, %203, %205 : vector<8x128xi1>, vector<8x128xf32>
    %207 = arith.subf %4, %166 : vector<8x128xf32>
    %208 = arith.mulf %207, %171 : vector<8x128xf32>
    %209 = math.absf %208 : vector<8x128xf32>
    %cst_84 = arith.constant 0.327591091 : f32
    %210 = vector.broadcast %cst_84 : f32 to vector<8x128xf32>
    %211 = arith.mulf %210, %209 : vector<8x128xf32>
    %cst_85 = arith.constant 1.000000e+00 : f32
    %212 = vector.broadcast %cst_85 : f32 to vector<8x128xf32>
    %213 = arith.addf %212, %211 : vector<8x128xf32>
    %cst_86 = arith.constant 1.000000e+00 : f32
    %214 = vector.broadcast %cst_86 : f32 to vector<8x128xf32>
    %215 = arith.divf %214, %213 : vector<8x128xf32>
    %cst_87 = arith.constant 1.06140542 : f32
    %216 = vector.broadcast %cst_87 : f32 to vector<8x128xf32>
    %217 = arith.mulf %215, %216 : vector<8x128xf32>
    %cst_88 = arith.constant -1.45315206 : f32
    %218 = vector.broadcast %cst_88 : f32 to vector<8x128xf32>
    %219 = arith.addf %218, %217 : vector<8x128xf32>
    %220 = arith.mulf %215, %219 : vector<8x128xf32>
    %cst_89 = arith.constant 1.42141378 : f32
    %221 = vector.broadcast %cst_89 : f32 to vector<8x128xf32>
    %222 = arith.addf %221, %220 : vector<8x128xf32>
    %223 = arith.mulf %215, %222 : vector<8x128xf32>
    %cst_90 = arith.constant -0.284496725 : f32
    %224 = vector.broadcast %cst_90 : f32 to vector<8x128xf32>
    %225 = arith.addf %224, %223 : vector<8x128xf32>
    %226 = arith.mulf %215, %225 : vector<8x128xf32>
    %cst_91 = arith.constant 0.254829586 : f32
    %227 = vector.broadcast %cst_91 : f32 to vector<8x128xf32>
    %228 = arith.addf %227, %226 : vector<8x128xf32>
    %229 = arith.mulf %215, %228 : vector<8x128xf32>
    %230 = arith.mulf %209, %209 : vector<8x128xf32>
    %cst_92 = arith.constant 0.000000e+00 : f32
    %231 = vector.broadcast %cst_92 : f32 to vector<8x128xf32>
    %232 = arith.subf %231, %230 : vector<8x128xf32>
    %233 = math.exp %232 : vector<8x128xf32>
    %234 = arith.mulf %229, %233 : vector<8x128xf32>
    %cst_93 = arith.constant 0.000000e+00 : f32
    %235 = vector.broadcast %cst_93 : f32 to vector<8x128xf32>
    %236 = arith.cmpf olt, %208, %235 : vector<8x128xf32>
    %cst_94 = arith.constant 1.000000e+00 : f32
    %237 = vector.broadcast %cst_94 : f32 to vector<8x128xf32>
    %238 = arith.subf %234, %237 : vector<8x128xf32>
    %cst_95 = arith.constant 1.000000e+00 : f32
    %239 = vector.broadcast %cst_95 : f32 to vector<8x128xf32>
    %240 = arith.subf %239, %234 : vector<8x128xf32>
    %241 = arith.select %236, %238, %240 : vector<8x128xi1>, vector<8x128xf32>
    %242 = arith.subf %206, %241 : vector<8x128xf32>
    %c0_96 = arith.constant 0 : index
    %c0_97 = arith.constant 0 : index
    %243 = vector.load %arg10[%c0_96, %c0_97] : memref<8x128xf32, #tpu.memory_space<vmem>>, vector<8x128xf32>
    %244 = math.absf %242 : vector<8x128xf32>
    %245 = arith.mulf %243, %244 : vector<8x128xf32>
    %246 = arith.addf %165, %245 : vector<8x128xf32>
    %cst_98 = arith.constant 5.000000e-01 : f32
    %247 = vector.broadcast %cst_98 : f32 to vector<8x128xf32>
    %248 = arith.mulf %247, %246 : vector<8x128xf32>
    %cst_99 = arith.constant 9.99999997E-7 : f32
    %249 = vector.broadcast %cst_99 : f32 to vector<8x128xf32>
    %250 = arith.maximumf %248, %249 : vector<8x128xf32>
    %251 = math.log %250 : vector<8x128xf32>
    %cst_100 = arith.constant 2.000000e+00 : f32
    %252 = math.log %cst_100 : f32
    %253 = vector.broadcast %252 : f32 to vector<8x128xf32>
    %254 = arith.divf %251, %253 : vector<8x128xf32>
    %cst_101 = arith.constant 0.000000e+00 : f32
    %255 = vector.broadcast %cst_101 : f32 to vector<8x128xf32>
    %256 = arith.subf %255, %254 : vector<8x128xf32>
    %c0_102 = arith.constant 0 : index
    %c0_103 = arith.constant 0 : index
    %257 = vector.load %arg11[%c0_102, %c0_103] : memref<8x128xf32, #tpu.memory_space<vmem>>, vector<8x128xf32>
    tpu.vector_store %arg11[%c0_102, %c0_103], %256 {strides = array<i32>} : memref<8x128xf32, #tpu.memory_space<vmem>>, vector<8x128xf32>,
    return
  }
  func.func @transform_0(%arg0: i32) -> (i32, i32) {
    %c0_i32 = arith.constant 0 : i32
    %c0_i32_0 = arith.constant 0 : i32
    return %arg0, %c0_i32 : i32, i32
  }
  func.func @transform_1(%arg0: i32) -> (i32, i32) {
    %c0_i32 = arith.constant 0 : i32
    %c0_i32_0 = arith.constant 0 : i32
    return %arg0, %c0_i32 : i32, i32
  }
  func.func @transform_2(%arg0: i32) -> (i32, i32) {
    %c0_i32 = arith.constant 0 : i32
    %c0_i32_0 = arith.constant 0 : i32
    return %arg0, %c0_i32 : i32, i32
  }
  func.func @transform_3(%arg0: i32) -> (i32, i32) {
    %c0_i32 = arith.constant 0 : i32
    %c0_i32_0 = arith.constant 0 : i32
    return %arg0, %c0_i32 : i32, i32
  }
  func.func @transform_4(%arg0: i32) -> (i32, i32) {
    %c0_i32 = arith.constant 0 : i32
    %c0_i32_0 = arith.constant 0 : i32
    return %arg0, %c0_i32 : i32, i32
  }
  func.func @transform_5(%arg0: i32) -> (i32, i32) {
    %c0_i32 = arith.constant 0 : i32
    %c0_i32_0 = arith.constant 0 : i32
    return %arg0, %c0_i32 : i32, i32
  }
  func.func @transform_6(%arg0: i32) -> (i32, i32) {
    %c0_i32 = arith.constant 0 : i32
    %c0_i32_0 = arith.constant 0 : i32
    return %arg0, %c0_i32 : i32, i32
  }
  func.func @transform_7(%arg0: i32) -> (i32, i32) {
    %c0_i32 = arith.constant 0 : i32
    %c0_i32_0 = arith.constant 0 : i32
    return %arg0, %c0_i32 : i32, i32
  }
  func.func @transform_8(%arg0: i32) -> (i32, i32) {
    %c0_i32 = arith.constant 0 : i32
    %c0_i32_0 = arith.constant 0 : i32
    return %arg0, %c0_i32 : i32, i32
  }
  func.func @transform_9(%arg0: i32) -> (i32, i32) {
    %c0_i32 = arith.constant 0 : i32
    %c0_i32_0 = arith.constant 0 : i32
    return %arg0, %c0_i32 : i32, i32
  }
  func.func @transform_10(%arg0: i32) -> (i32, i32) {
    %c0_i32 = arith.constant 0 : i32
    %c0_i32_0 = arith.constant 0 : i32
    return %arg0, %c0_i32 : i32, i32
  }
}

</mosaic_0001>

<llo_original>
// kernel: tpu_custom_call.1
$region0: #{tpu_custom_call.1}
  #allocation0 [shape = 'u32[]', space=smem, size = 0x4, offset = 0x4, fixed_abs, tag = 'smem constant byte address 0x4 - core index']
  #allocation1 [shape = 'u32[144,128]{1,0:T(1,128)}', space=vmem, size = 0x12000, scoped, tag = 'internal scratch']
  %s0 = inlined_call_operand.hbm [shape: f32[16,128], index: 0, kind: input, shape index: {}]
  %s1 = inlined_call_operand.hbm [shape: f32[16,128], index: 1, kind: input, shape index: {}]
  %s2 = inlined_call_operand.hbm [shape: f32[16,128], index: 2, kind: input, shape index: {}]
  %s3 = inlined_call_operand.hbm [shape: f32[16,128], index: 3, kind: input, shape index: {}]
  %s4 = inlined_call_operand.hbm [shape: f32[16,128], index: 4, kind: input, shape index: {}]
  %s5 = inlined_call_operand.vmem [shape: f32[16,128], index: 5, kind: input, shape index: {}]
  %s6 = inlined_call_operand.hbm [shape: f32[16,128], index: 6, kind: input, shape index: {}]
  %s7 = inlined_call_operand.hbm [shape: f32[16,128], index: 7, kind: input, shape index: {}]
  %s8 = inlined_call_operand.hbm [shape: f32[16,128], index: 8, kind: input, shape index: {}]
  %s9 = inlined_call_operand.vmem [shape: f32[16,128], index: 9, kind: input, shape index: {}]
  %s10 = inlined_call_operand.hbm [shape: f32[16,128], index: 10, kind: output, shape index: {}]
  %s11 = sld [smem:[#allocation0]]
  $region105: #{tpu_custom_call.1} parent=0
    _
  %s13 = ssub.s32 1, %s11
  %s14 = scalar_select 0, %s13, %s11
  $region1: #{tpu_custom_call.1} parent=0
    #allocation2 [shape = 'u8[8192]{0}', space=vmem, size = 0x2000, scoped, tag = 'input window, operand 0']
    #allocation3 [shape = 's32[2]{0}', space=sflag, size = 0x8, scoped, tag = 'scoped memory for tpu_custom_call.1']
    #allocation4 [shape = 's32[2]{0}', space=sflag, size = 0x8, scoped, tag = 'scoped memory for tpu_custom_call.1']
    #allocation5 [shape = 'u8[8192]{0}', space=vmem, size = 0x2000, scoped, tag = 'input window, operand 1']
    #allocation6 [shape = 's32[2]{0}', space=sflag, size = 0x8, scoped, tag = 'scoped memory for tpu_custom_call.1']
    #allocation7 [shape = 'u8[8192]{0}', space=vmem, size = 0x2000, scoped, tag = 'input window, operand 2']
    #allocation8 [shape = 'u8[8192]{0}', space=vmem, size = 0x2000, scoped, tag = 'input window, operand 3']
    #allocation9 [shape = 's32[2]{0}', space=sflag, size = 0x8, scoped, tag = 'scoped memory for tpu_custom_call.1']
    #allocation10 [shape = 'u8[8192]{0}', space=vmem, size = 0x2000, scoped, tag = 'input window, operand 4']
    #allocation11 [shape = 'u8[8192]{0}', space=vmem, size = 0x2000, scoped, tag = 'input window, operand 6']
    #allocation12 [shape = 's32[2]{0}', space=sflag, size = 0x8, scoped, tag = 'scoped memory for tpu_custom_call.1']
    #allocation13 [shape = 'u8[8192]{0}', space=vmem, size = 0x2000, scoped, tag = 'input window, operand 7']
    #allocation14 [shape = 'u8[8192]{0}', space=vmem, size = 0x2000, scoped, tag = 'input window, operand 8']
    #allocation15 [shape = 's32[2]{0}', space=sflag, size = 0x8, scoped, tag = 'scoped memory for tpu_custom_call.1']
    #allocation16 [shape = 'u8[8192]{0}', space=vmem, size = 0x2000, scoped, tag = 'output window, operand 0']
    %15 = vsyncpa [#allocation3], 0
    %s16 = scalar_lea.sflag [#allocation3], 1
    %17 = vsyncpa %s16, 0
    %18 = vsyncpa [#allocation6], 0
    %s19 = scalar_lea.sflag [#allocation6], 1
    %20 = vsyncpa %s19, 0
    %21 = vsyncpa [#allocation9], 0
    %s22 = scalar_lea.sflag [#allocation9], 1
    %23 = vsyncpa %s22, 0
    %24 = vsyncpa [#allocation12], 0
    %s25 = scalar_lea.sflag [#allocation12], 1
    %26 = vsyncpa %s25, 0
    %27 = vsyncpa [#allocation15], 0
    %s28 = scalar_lea.sflag [#allocation15], 1
    %29 = vsyncpa %s28, 0
    %30 = vsyncpa [#allocation4], 0
    %s31 = scalar_lea.sflag [#allocation4], 1
    %32 = vsyncpa %s31, 0
    loop: start=0, step=1, limit=4
    $region2: #{tpu_custom_call.1} parent=1 // loop_pre_header
      _
    $region3: #{tpu_custom_call.1} parent=1 // loop_header
      %s34 = sphi 0, %s38
      %p35 = scmp.ge.s32.totalorder %s34, 4
      %s44 = sphi 0, %s46
      %s47 = sphi 0, %s44
      %s48 = sphi 0, %s47
      %s64 = sphi 0, %s48
      %s70 = sphi 0, %s72
      %s73 = sphi 0, %s70
      %s74 = sphi 0, %s73
      %s90 = sphi 0, %s74
      %s96 = sphi 0, %s98
      %s99 = sphi 0, %s96
      %s100 = sphi 0, %s99
      %s116 = sphi 0, %s100
      %s122 = sphi 0, %s124
      %s125 = sphi 0, %s122
      %s126 = sphi 0, %s125
      %s142 = sphi 0, %s126
      %s148 = sphi 0, %s150
      %s151 = sphi 0, %s148
      %s152 = sphi 0, %s151
      %s168 = sphi 0, %s152
      %s174 = sphi 0, %s176
      %s177 = sphi 0, %s174
      %s178 = sphi 0, %s177
      %s194 = sphi 0, %s178
      %s200 = sphi 0, %s202
      %s203 = sphi 0, %s200
      %s204 = sphi 0, %s203
      %s220 = sphi 0, %s204
      %s226 = sphi 0, %s228
      %s229 = sphi 0, %s226
      %s230 = sphi 0, %s229
      %s246 = sphi 0, %s230
      %s252 = sphi 0, %s254
      %s255 = sphi 0, %s252
      %s256 = sphi 0, %s255
      %s272 = sphi 0, %s256
      %s278 = sphi 0, %s280
      %s281 = sphi 0, %s278
      %s282 = sphi 0, %s281
      %s298 = sphi 0, %s282
      %s304 = sphi 0, %s306
      %s307 = sphi 0, %s304
      %s308 = sphi 0, %s307
      %s324 = sphi 0, %s308
    $region4: #{tpu_custom_call.1} parent=1 // loop_header_branch
      %37 = sbr.rel (%p35) target = $region8
    $region5: #{tpu_custom_call.1} parent=1 // loop_body
      %s39 = ssub.s32 %s34, 1
      %s40 = ssub.s32 %s34, 2
      %s41 = sadd.s32 %s34, 1
      %s42 = ssub.s32 %s34, %s41
      %p43 = scmp.eq.s32.totalorder %s42, 0
      %s45 = sadd.s32 %s44, 1
      %s46 = scalar_select %p43, %s44, %s45
      %p49 = pneg %p43
      %p50 = scmp.eq.s32.totalorder %s34, 1
      %p51 = por %p49, %p50
      %p52 = scmp.ne.s32.totalorder %s44, %s47
      %p53 = scmp.eq.s32.totalorder %s34, 0
      %p54 = por %p52, %p53
      %p55 = scmp.ne.s32.totalorder %s44, %s47
      %p56 = scmp.eq.s32.totalorder %s39, 1
      %p57 = por %p55, %p56
      %p58 = scmp.ne.s32.totalorder %s47, %s48
      %p59 = scmp.eq.s32.totalorder %s39, 0
      %p60 = por %p58, %p59
      %p61 = scmp.ne.s32.totalorder %s47, %s48
      %p62 = scmp.eq.s32.totalorder %s40, 1
      %p63 = por %p61, %p62
      %p65 = scmp.ne.s32.totalorder %s48, %s64
      %p66 = scmp.eq.s32.totalorder %s40, 0
      %p67 = por %p65, %p66
      %s68 = ssub.s32 %s34, %s41
      %p69 = scmp.eq.s32.totalorder %s68, 0
      %s71 = sadd.s32 %s70, 1
      %s72 = scalar_select %p69, %s70, %s71
      %p75 = pneg %p69
      %p76 = scmp.eq.s32.totalorder %s34, 1
      %p77 = por %p75, %p76
      %p78 = scmp.ne.s32.totalorder %s70, %s73
      %p79 = scmp.eq.s32.totalorder %s34, 0
      %p80 = por %p78, %p79
      %p81 = scmp.ne.s32.totalorder %s70, %s73
      %p82 = scmp.eq.s32.totalorder %s39, 1
      %p83 = por %p81, %p82
      %p84 = scmp.ne.s32.totalorder %s73, %s74
      %p85 = scmp.eq.s32.totalorder %s39, 0
      %p86 = por %p84, %p85
      %p87 = scmp.ne.s32.totalorder %s73, %s74
      %p88 = scmp.eq.s32.totalorder %s40, 1
      %p89 = por %p87, %p88
      %p91 = scmp.ne.s32.totalorder %s74, %s90
      %p92 = scmp.eq.s32.totalorder %s40, 0
      %p93 = por %p91, %p92
      %s94 = ssub.s32 %s34, %s41
      %p95 = scmp.eq.s32.totalorder %s94, 0
      %s97 = sadd.s32 %s96, 1
      %s98 = scalar_select %p95, %s96, %s97
      %p101 = pneg %p95
      %p102 = scmp.eq.s32.totalorder %s34, 1
      %p103 = por %p101, %p102
      %p104 = scmp.ne.s32.totalorder %s96, %s99
      %p105 = scmp.eq.s32.totalorder %s34, 0
      %p106 = por %p104, %p105
      %p107 = scmp.ne.s32.totalorder %s96, %s99
      %p108 = scmp.eq.s32.totalorder %s39, 1
      %p109 = por %p107, %p108
      %p110 = scmp.ne.s32.totalorder %s99, %s100
      %p111 = scmp.eq.s32.totalorder %s39, 0
      %p112 = por %p110, %p111
      %p113 = scmp.ne.s32.totalorder %s99, %s100
      %p114 = scmp.eq.s32.totalorder %s40, 1
      %p115 = por %p113, %p114
      %p117 = scmp.ne.s32.totalorder %s100, %s116
      %p118 = scmp.eq.s32.totalorder %s40, 0
      %p119 = por %p117, %p118
      %s120 = ssub.s32 %s34, %s41
      %p121 = scmp.eq.s32.totalorder %s120, 0
      %s123 = sadd.s32 %s122, 1
      %s124 = scalar_select %p121, %s122, %s123
      %p127 = pneg %p121
      %p128 = scmp.eq.s32.totalorder %s34, 1
      %p129 = por %p127, %p128
      %p130 = scmp.ne.s32.totalorder %s122, %s125
      %p131 = scmp.eq.s32.totalorder %s34, 0
      %p132 = por %p130, %p131
      %p133 = scmp.ne.s32.totalorder %s122, %s125
      %p134 = scmp.eq.s32.totalorder %s39, 1
      %p135 = por %p133, %p134
      %p136 = scmp.ne.s32.totalorder %s125, %s126
      %p137 = scmp.eq.s32.totalorder %s39, 0
      %p138 = por %p136, %p137
      %p139 = scmp.ne.s32.totalorder %s125, %s126
      %p140 = scmp.eq.s32.totalorder %s40, 1
      %p141 = por %p139, %p140
      %p143 = scmp.ne.s32.totalorder %s126, %s142
      %p144 = scmp.eq.s32.totalorder %s40, 0
      %p145 = por %p143, %p144
      %s146 = ssub.s32 %s34, %s41
      %p147 = scmp.eq.s32.totalorder %s146, 0
      %s149 = sadd.s32 %s148, 1
      %s150 = scalar_select %p147, %s148, %s149
      %p153 = pneg %p147
      %p154 = scmp.eq.s32.totalorder %s34, 1
      %p155 = por %p153, %p154
      %p156 = scmp.ne.s32.totalorder %s148, %s151
      %p157 = scmp.eq.s32.totalorder %s34, 0
      %p158 = por %p156, %p157
      %p159 = scmp.ne.s32.totalorder %s148, %s151
      %p160 = scmp.eq.s32.totalorder %s39, 1
      %p161 = por %p159, %p160
      %p162 = scmp.ne.s32.totalorder %s151, %s152
      %p163 = scmp.eq.s32.totalorder %s39, 0
      %p164 = por %p162, %p163
      %p165 = scmp.ne.s32.totalorder %s151, %s152
      %p166 = scmp.eq.s32.totalorder %s40, 1
      %p167 = por %p165, %p166
      %p169 = scmp.ne.s32.totalorder %s152, %s168
      %p170 = scmp.eq.s32.totalorder %s40, 0
      %p171 = por %p169, %p170
      %s172 = ssub.s32 %s34, %s41
      %p173 = scmp.eq.s32.totalorder %s172, 0
      %s175 = sadd.s32 %s174, 1
      %s176 = scalar_select %p173, %s174, %s175
      %p179 = pneg %p173
      %p180 = scmp.eq.s32.totalorder %s34, 1
      %p181 = por %p179, %p180
      %p182 = scmp.ne.s32.totalorder %s174, %s177
      %p183 = scmp.eq.s32.totalorder %s34, 0
      %p184 = por %p182, %p183
      %p185 = scmp.ne.s32.totalorder %s174, %s177
      %p186 = scmp.eq.s32.totalorder %s39, 1
      %p187 = por %p185, %p186
      %p188 = scmp.ne.s32.totalorder %s177, %s178
      %p189 = scmp.eq.s32.totalorder %s39, 0
      %p190 = por %p188, %p189
      %p191 = scmp.ne.s32.totalorder %s177, %s178
      %p192 = scmp.eq.s32.totalorder %s40, 1
      %p193 = por %p191, %p192
      %p195 = scmp.ne.s32.totalorder %s178, %s194
      %p196 = scmp.eq.s32.totalorder %s40, 0
      %p197 = por %p195, %p196
      %s198 = ssub.s32 %s34, %s41
      %p199 = scmp.eq.s32.totalorder %s198, 0
      %s201 = sadd.s32 %s200, 1
      %s202 = scalar_select %p199, %s200, %s201
      %p205 = pneg %p199
      %p206 = scmp.eq.s32.totalorder %s34, 1
      %p207 = por %p205, %p206
      %p208 = scmp.ne.s32.totalorder %s200, %s203
      %p209 = scmp.eq.s32.totalorder %s34, 0
      %p210 = por %p208, %p209
      %p211 = scmp.ne.s32.totalorder %s200, %s203
      %p212 = scmp.eq.s32.totalorder %s39, 1
      %p213 = por %p211, %p212
      %p214 = scmp.ne.s32.totalorder %s203, %s204
      %p215 = scmp.eq.s32.totalorder %s39, 0
      %p216 = por %p214, %p215
      %p217 = scmp.ne.s32.totalorder %s203, %s204
      %p218 = scmp.eq.s32.totalorder %s40, 1
      %p219 = por %p217, %p218
      %p221 = scmp.ne.s32.totalorder %s204, %s220
      %p222 = scmp.eq.s32.totalorder %s40, 0
      %p223 = por %p221, %p222
      %s224 = ssub.s32 %s34, %s41
      %p225 = scmp.eq.s32.totalorder %s224, 0
      %s227 = sadd.s32 %s226, 1
      %s228 = scalar_select %p225, %s226, %s227
      %p231 = pneg %p225
      %p232 = scmp.eq.s32.totalorder %s34, 1
      %p233 = por %p231, %p232
      %p234 = scmp.ne.s32.totalorder %s226, %s229
      %p235 = scmp.eq.s32.totalorder %s34, 0
      %p236 = por %p234, %p235
      %p237 = scmp.ne.s32.totalorder %s226, %s229
      %p238 = scmp.eq.s32.totalorder %s39, 1
      %p239 = por %p237, %p238
      %p240 = scmp.ne.s32.totalorder %s229, %s230
      %p241 = scmp.eq.s32.totalorder %s39, 0
      %p242 = por %p240, %p241
      %p243 = scmp.ne.s32.totalorder %s229, %s230
      %p244 = scmp.eq.s32.totalorder %s40, 1
      %p245 = por %p243, %p244
      %p247 = scmp.ne.s32.totalorder %s230, %s246
      %p248 = scmp.eq.s32.totalorder %s40, 0
      %p249 = por %p247, %p248
      %s250 = ssub.s32 %s34, %s41
      %p251 = scmp.eq.s32.totalorder %s250, 0
      %s253 = sadd.s32 %s252, 1
      %s254 = scalar_select %p251, %s252, %s253
      %p257 = pneg %p251
      %p258 = scmp.eq.s32.totalorder %s34, 1
      %p259 = por %p257, %p258
      %p260 = scmp.ne.s32.totalorder %s252, %s255
      %p261 = scmp.eq.s32.totalorder %s34, 0
      %p262 = por %p260, %p261
      %p263 = scmp.ne.s32.totalorder %s252, %s255
      %p264 = scmp.eq.s32.totalorder %s39, 1
      %p265 = por %p263, %p264
      %p266 = scmp.ne.s32.totalorder %s255, %s256
      %p267 = scmp.eq.s32.totalorder %s39, 0
      %p268 = por %p266, %p267
      %p269 = scmp.ne.s32.totalorder %s255, %s256
      %p270 = scmp.eq.s32.totalorder %s40, 1
      %p271 = por %p269, %p270
      %p273 = scmp.ne.s32.totalorder %s256, %s272
      %p274 = scmp.eq.s32.totalorder %s40, 0
      %p275 = por %p273, %p274
      %s276 = ssub.s32 %s34, %s41
      %p277 = scmp.eq.s32.totalorder %s276, 0
      %s279 = sadd.s32 %s278, 1
      %s280 = scalar_select %p277, %s278, %s279
      %p283 = pneg %p277
      %p284 = scmp.eq.s32.totalorder %s34, 1
      %p285 = por %p283, %p284
      %p286 = scmp.ne.s32.totalorder %s278, %s281
      %p287 = scmp.eq.s32.totalorder %s34, 0
      %p288 = por %p286, %p287
      %p289 = scmp.ne.s32.totalorder %s278, %s281
      %p290 = scmp.eq.s32.totalorder %s39, 1
      %p291 = por %p289, %p290
      %p292 = scmp.ne.s32.totalorder %s281, %s282
      %p293 = scmp.eq.s32.totalorder %s39, 0
      %p294 = por %p292, %p293
      %p295 = scmp.ne.s32.totalorder %s281, %s282
      %p296 = scmp.eq.s32.totalorder %s40, 1
      %p297 = por %p295, %p296
      %p299 = scmp.ne.s32.totalorder %s282, %s298
      %p300 = scmp.eq.s32.totalorder %s40, 0
      %p301 = por %p299, %p300
      %s302 = ssub.s32 %s34, %s41
      %p303 = scmp.eq.s32.totalorder %s302, 0
      %s305 = sadd.s32 %s304, 1
      %s306 = scalar_select %p303, %s304, %s305
      %p309 = pneg %p303
      %p310 = scmp.eq.s32.totalorder %s34, 1
      %p311 = por %p309, %p310
      %p312 = scmp.ne.s32.totalorder %s304, %s307
      %p313 = scmp.eq.s32.totalorder %s34, 0
      %p314 = por %p312, %p313
      %p315 = scmp.ne.s32.totalorder %s304, %s307
      %p316 = scmp.eq.s32.totalorder %s39, 1
      %p317 = por %p315, %p316
      %p318 = scmp.ne.s32.totalorder %s307, %s308
      %p319 = scmp.eq.s32.totalorder %s39, 0
      %p320 = por %p318, %p319
      %p321 = scmp.ne.s32.totalorder %s307, %s308
      %p322 = scmp.eq.s32.totalorder %s40, 1
      %p323 = por %p321, %p322
      %p325 = scmp.ne.s32.totalorder %s308, %s324
      %p326 = scmp.eq.s32.totalorder %s40, 0
      %p327 = por %p325, %p326
      %p328 = scmp.le.s32.totalorder 1, %s34
      %p329 = scmp.lt.s32.totalorder %s34, 3
      %p330 = pnand %p328, %p329
      %p331 = pneg %p330
      // Predicated region
      $region9: #{tpu_custom_call.1} parent=5 // pred_check
        _
      $region10: #{tpu_custom_call.1} parent=5 // pred_check_branch
        %333 = sbr.rel (%p330) target = $region12
      $region11: #{tpu_custom_call.1} parent=5 // pred_region
        %s334 = ssub.s32 %s34, 1
      $region12: #{tpu_custom_call.1} parent=5 // pred_fallthru
        _
      %p335 = scmp.lt.s32.totalorder %s34, 2
      // Predicated region
      $region13: #{tpu_custom_call.1} parent=5 // pred_check
        %p336 = pneg %p335
      $region14: #{tpu_custom_call.1} parent=5 // pred_check_branch
        %338 = sbr.rel (%p336) target = $region16
      $region15: #{tpu_custom_call.1} parent=5 // pred_region
        // Predicated region
        $region17: #{tpu_custom_call.1} parent=15 // pred_check
          %p339 = pneg %p54
        $region18: #{tpu_custom_call.1} parent=15 // pred_check_branch
          %341 = sbr.rel (%p339) target = $region20
        $region19: #{tpu_custom_call.1} parent=15 // pred_region
          %s342 = sand.u32 %s44, 1
          %s343 = scalar_lea.sflag [#allocation3], %s342
          %s344 = sand.u32 %s44, 1
          %s345 = smul.addr %s344, 8
          %s346 = scalar_lea.vmem [#allocation2], %s345
          %s348 = ssub.s32 128, 128
          %349 = vsyncadd %s343, %s348
          %s350 = smul.addr %s34, 128
          %s351 = scalar_lea.hbm %s0, %s350
          %s353 = sshll.u32 %s346, 4
          %s354 = int_to_ptr.vmem [resolvable:$true] %s353
          %356 = dma.hbm_to_vmem [thread:$0]  %s351, 128, %s354, %s343
        $region20: #{tpu_custom_call.1} parent=15 // pred_fallthru
          _
        // Predicated region
        $region21: #{tpu_custom_call.1} parent=15 // pred_check
          %p357 = pneg %p80
        $region22: #{tpu_custom_call.1} parent=15 // pred_check_branch
          %359 = sbr.rel (%p357) target = $region24
        $region23: #{tpu_custom_call.1} parent=15 // pred_region
          %s360 = sand.u32 %s34, 1
          %s361 = scalar_lea.sflag [#allocation6], %s360
          %s362 = sand.u32 %s70, 1
          %s363 = smul.addr %s362, 8
          %s364 = scalar_lea.vmem [#allocation5], %s363
          %s366 = ssub.s32 128, 128
          %367 = vsyncadd %s361, %s366
          %s368 = smul.addr %s34, 128
          %s369 = scalar_lea.hbm %s1, %s368
          %s371 = sshll.u32 %s364, 4
          %s372 = int_to_ptr.vmem [resolvable:$true] %s371
          %374 = dma.hbm_to_vmem [thread:$0]  %s369, 128, %s372, %s361
        $region24: #{tpu_custom_call.1} parent=15 // pred_fallthru
          _
        // Predicated region
        $region25: #{tpu_custom_call.1} parent=15 // pred_check
          %p375 = pneg %p106
        $region26: #{tpu_custom_call.1} parent=15 // pred_check_branch
          %377 = sbr.rel (%p375) target = $region28
        $region27: #{tpu_custom_call.1} parent=15 // pred_region
          %s378 = sand.u32 %s34, 1
          %s379 = scalar_lea.sflag [#allocation6], %s378
          %s380 = sand.u32 %s96, 1
          %s381 = smul.addr %s380, 8
          %s382 = scalar_lea.vmem [#allocation7], %s381
          %s384 = ssub.s32 128, 128
          %385 = vsyncadd %s379, %s384
          %s386 = smul.addr %s34, 128
          %s387 = scalar_lea.hbm %s2, %s386
          %s389 = sshll.u32 %s382, 4
          %s390 = int_to_ptr.vmem [resolvable:$true] %s389
          %392 = dma.hbm_to_vmem [thread:$0]  %s387, 128, %s390, %s379
        $region28: #{tpu_custom_call.1} parent=15 // pred_fallthru
          _
        // Predicated region
        $region29: #{tpu_custom_call.1} parent=15 // pred_check
          %p393 = pneg %p132
        $region30: #{tpu_custom_call.1} parent=15 // pred_check_branch
          %395 = sbr.rel (%p393) target = $region32
        $region31: #{tpu_custom_call.1} parent=15 // pred_region
          %s396 = sand.u32 %s34, 1
          %s397 = scalar_lea.sflag [#allocation9], %s396
          %s398 = sand.u32 %s122, 1
          %s399 = smul.addr %s398, 8
          %s400 = scalar_lea.vmem [#allocation8], %s399
          %s402 = ssub.s32 128, 128
          %403 = vsyncadd %s397, %s402
          %s404 = smul.addr %s34, 128
          %s405 = scalar_lea.hbm %s3, %s404
          %s407 = sshll.u32 %s400, 4
          %s408 = int_to_ptr.vmem [resolvable:$true] %s407
          %410 = dma.hbm_to_vmem [thread:$0]  %s405, 128, %s408, %s397
        $region32: #{tpu_custom_call.1} parent=15 // pred_fallthru
          _
        // Predicated region
        $region33: #{tpu_custom_call.1} parent=15 // pred_check
          %p411 = pneg %p158
        $region34: #{tpu_custom_call.1} parent=15 // pred_check_branch
          %413 = sbr.rel (%p411) target = $region36
        $region35: #{tpu_custom_call.1} parent=15 // pred_region
          %s414 = sand.u32 %s34, 1
          %s415 = scalar_lea.sflag [#allocation9], %s414
          %s416 = sand.u32 %s148, 1
          %s417 = smul.addr %s416, 8
          %s418 = scalar_lea.vmem [#allocation10], %s417
          %s420 = ssub.s32 128, 128
          %421 = vsyncadd %s415, %s420
          %s422 = smul.addr %s34, 128
          %s423 = scalar_lea.hbm %s4, %s422
          %s425 = sshll.u32 %s418, 4
          %s426 = int_to_ptr.vmem [resolvable:$true] %s425
          %428 = dma.hbm_to_vmem [thread:$0]  %s423, 128, %s426, %s415
        $region36: #{tpu_custom_call.1} parent=15 // pred_fallthru
          _
        // Predicated region
        $region37: #{tpu_custom_call.1} parent=15 // pred_check
          %p429 = pneg %p184
        $region38: #{tpu_custom_call.1} parent=15 // pred_check_branch
          %431 = sbr.rel (%p429) target = $region40
        $region39: #{tpu_custom_call.1} parent=15 // pred_region
          %p432 = scmp.lt.s32.totalorder %s34, 1
          %s433 = scalar_select %p432, %s34, 1
          %s434 = smul.addr %s433, 8
          %s435 = scalar_lea.vmem %s5, %s434
        $region40: #{tpu_custom_call.1} parent=15 // pred_fallthru
          _
        // Predicated region
        $region41: #{tpu_custom_call.1} parent=15 // pred_check
          %p436 = pneg %p210
        $region42: #{tpu_custom_call.1} parent=15 // pred_check_branch
          %438 = sbr.rel (%p436) target = $region44
        $region43: #{tpu_custom_call.1} parent=15 // pred_region
          %s439 = sand.u32 %s34, 1
          %s440 = scalar_lea.sflag [#allocation12], %s439
          %s441 = sand.u32 %s200, 1
          %s442 = smul.addr %s441, 8
          %s443 = scalar_lea.vmem [#allocation11], %s442
          %s445 = ssub.s32 128, 128
          %446 = vsyncadd %s440, %s445
          %s447 = smul.addr %s34, 128
          %s448 = scalar_lea.hbm %s6, %s447
          %s450 = sshll.u32 %s443, 4
          %s451 = int_to_ptr.vmem [resolvable:$true] %s450
          %453 = dma.hbm_to_vmem [thread:$0]  %s448, 128, %s451, %s440
        $region44: #{tpu_custom_call.1} parent=15 // pred_fallthru
          _
        // Predicated region
        $region45: #{tpu_custom_call.1} parent=15 // pred_check
          %p454 = pneg %p236
        $region46: #{tpu_custom_call.1} parent=15 // pred_check_branch
          %456 = sbr.rel (%p454) target = $region48
        $region47: #{tpu_custom_call.1} parent=15 // pred_region
          %s457 = sand.u32 %s34, 1
          %s458 = scalar_lea.sflag [#allocation12], %s457
          %s459 = sand.u32 %s226, 1
          %s460 = smul.addr %s459, 8
          %s461 = scalar_lea.vmem [#allocation13], %s460
          %s463 = ssub.s32 128, 128
          %464 = vsyncadd %s458, %s463
          %s465 = smul.addr %s34, 128
          %s466 = scalar_lea.hbm %s7, %s465
          %s468 = sshll.u32 %s461, 4
          %s469 = int_to_ptr.vmem [resolvable:$true] %s468
          %471 = dma.hbm_to_vmem [thread:$0]  %s466, 128, %s469, %s458
        $region48: #{tpu_custom_call.1} parent=15 // pred_fallthru
          _
        // Predicated region
        $region49: #{tpu_custom_call.1} parent=15 // pred_check
          %p472 = pneg %p262
        $region50: #{tpu_custom_call.1} parent=15 // pred_check_branch
          %474 = sbr.rel (%p472) target = $region52
        $region51: #{tpu_custom_call.1} parent=15 // pred_region
          %s475 = sand.u32 %s252, 1
          %s476 = scalar_lea.sflag [#allocation15], %s475
          %s477 = sand.u32 %s252, 1
          %s478 = smul.addr %s477, 8
          %s479 = scalar_lea.vmem [#allocation14], %s478
          %s481 = ssub.s32 128, 128
          %482 = vsyncadd %s476, %s481
          %s483 = smul.addr %s34, 128
          %s484 = scalar_lea.hbm %s8, %s483
          %s486 = sshll.u32 %s479, 4
          %s487 = int_to_ptr.vmem [resolvable:$true] %s486
          %489 = dma.hbm_to_vmem [thread:$0]  %s484, 128, %s487, %s476
        $region52: #{tpu_custom_call.1} parent=15 // pred_fallthru
          _
        // Predicated region
        $region53: #{tpu_custom_call.1} parent=15 // pred_check
          %p490 = pneg %p288
        $region54: #{tpu_custom_call.1} parent=15 // pred_check_branch
          %492 = sbr.rel (%p490) target = $region56
        $region55: #{tpu_custom_call.1} parent=15 // pred_region
          %p493 = scmp.lt.s32.totalorder %s34, 1
          %s494 = scalar_select %p493, %s34, 1
          %s495 = smul.addr %s494, 8
          %s496 = scalar_lea.vmem %s9, %s495
        $region56: #{tpu_custom_call.1} parent=15 // pred_fallthru
          _
      $region16: #{tpu_custom_call.1} parent=5 // pred_fallthru
        _
      %p497 = scmp.le.s32.totalorder 1, %s34
      %p498 = scmp.lt.s32.totalorder %s34, 3
      %p499 = pnand %p497, %p498
      %p500 = pneg %p499
      // Predicated region
      $region57: #{tpu_custom_call.1} parent=5 // pred_check
        _
      $region58: #{tpu_custom_call.1} parent=5 // pred_check_branch
        %502 = sbr.rel (%p499) target = $region60
      $region59: #{tpu_custom_call.1} parent=5 // pred_region
        %s503 = ssub.s32 %s34, 1
        %s504 = sand.u32 %s47, 1
        %s505 = scalar_lea.sflag [#allocation3], %s504
        %s506 = sand.u32 %s47, 1
        %s507 = smul.addr %s506, 8
        %s508 = scalar_lea.vmem [#allocation2], %s507
        // Predicated region
        $region61: #{tpu_custom_call.1} parent=59 // pred_check
          %p509 = pneg %p60
        $region62: #{tpu_custom_call.1} parent=59 // pred_check_branch
          %511 = sbr.rel (%p509) target = $region64
        $region63: #{tpu_custom_call.1} parent=59 // pred_region
          %512 = dma.done %s505, 128
        $region64: #{tpu_custom_call.1} parent=59 // pred_fallthru
          _
        %s513 = sand.u32 %s39, 1
        %s514 = scalar_lea.sflag [#allocation6], %s513
        %s515 = sand.u32 %s73, 1
        %s516 = smul.addr %s515, 8
        %s517 = scalar_lea.vmem [#allocation5], %s516
        // Predicated region
        $region65: #{tpu_custom_call.1} parent=59 // pred_check
          %p518 = pneg %p86
        $region66: #{tpu_custom_call.1} parent=59 // pred_check_branch
          %520 = sbr.rel (%p518) target = $region68
        $region67: #{tpu_custom_call.1} parent=59 // pred_region
          %521 = dma.done %s514, 128
        $region68: #{tpu_custom_call.1} parent=59 // pred_fallthru
          _
        %s522 = sand.u32 %s39, 1
        %s523 = scalar_lea.sflag [#allocation6], %s522
        %s524 = sand.u32 %s99, 1
        %s525 = smul.addr %s524, 8
        %s526 = scalar_lea.vmem [#allocation7], %s525
        // Predicated region
        $region69: #{tpu_custom_call.1} parent=59 // pred_check
          %p527 = pneg %p112
        $region70: #{tpu_custom_call.1} parent=59 // pred_check_branch
          %529 = sbr.rel (%p527) target = $region72
        $region71: #{tpu_custom_call.1} parent=59 // pred_region
          %530 = dma.done %s523, 128
        $region72: #{tpu_custom_call.1} parent=59 // pred_fallthru
          _
        %s531 = sand.u32 %s39, 1
        %s532 = scalar_lea.sflag [#allocation9], %s531
        %s533 = sand.u32 %s125, 1
        %s534 = smul.addr %s533, 8
        %s535 = scalar_lea.vmem [#allocation8], %s534
        // Predicated region
        $region73: #{tpu_custom_call.1} parent=59 // pred_check
          %p536 = pneg %p138
        $region74: #{tpu_custom_call.1} parent=59 // pred_check_branch
          %538 = sbr.rel (%p536) target = $region76
        $region75: #{tpu_custom_call.1} parent=59 // pred_region
          %539 = dma.done %s532, 128
        $region76: #{tpu_custom_call.1} parent=59 // pred_fallthru
          _
        %s540 = sand.u32 %s39, 1
        %s541 = scalar_lea.sflag [#allocation9], %s540
        %s542 = sand.u32 %s151, 1
        %s543 = smul.addr %s542, 8
        %s544 = scalar_lea.vmem [#allocation10], %s543
        // Predicated region
        $region77: #{tpu_custom_call.1} parent=59 // pred_check
          %p545 = pneg %p164
        $region78: #{tpu_custom_call.1} parent=59 // pred_check_branch
          %547 = sbr.rel (%p545) target = $region80
        $region79: #{tpu_custom_call.1} parent=59 // pred_region
          %548 = dma.done %s541, 128
        $region80: #{tpu_custom_call.1} parent=59 // pred_fallthru
          _
        %s549 = sand.u32 %s39, 1
        %s550 = scalar_lea.sflag [#allocation12], %s549
        %s551 = sand.u32 %s203, 1
        %s552 = smul.addr %s551, 8
        %s553 = scalar_lea.vmem [#allocation11], %s552
        // Predicated region
        $region81: #{tpu_custom_call.1} parent=59 // pred_check
          %p554 = pneg %p216
        $region82: #{tpu_custom_call.1} parent=59 // pred_check_branch
          %556 = sbr.rel (%p554) target = $region84
        $region83: #{tpu_custom_call.1} parent=59 // pred_region
          %557 = dma.done %s550, 128
        $region84: #{tpu_custom_call.1} parent=59 // pred_fallthru
          _
        %s558 = sand.u32 %s39, 1
        %s559 = scalar_lea.sflag [#allocation12], %s558
        %s560 = sand.u32 %s229, 1
        %s561 = smul.addr %s560, 8
        %s562 = scalar_lea.vmem [#allocation13], %s561
        // Predicated region
        $region85: #{tpu_custom_call.1} parent=59 // pred_check
          %p563 = pneg %p242
        $region86: #{tpu_custom_call.1} parent=59 // pred_check_branch
          %565 = sbr.rel (%p563) target = $region88
        $region87: #{tpu_custom_call.1} parent=59 // pred_region
          %566 = dma.done %s559, 128
        $region88: #{tpu_custom_call.1} parent=59 // pred_fallthru
          _
        %s567 = sand.u32 %s255, 1
        %s568 = scalar_lea.sflag [#allocation15], %s567
        %s569 = sand.u32 %s255, 1
        %s570 = smul.addr %s569, 8
        %s571 = scalar_lea.vmem [#allocation14], %s570
        // Predicated region
        $region89: #{tpu_custom_call.1} parent=59 // pred_check
          %p572 = pneg %p268
        $region90: #{tpu_custom_call.1} parent=59 // pred_check_branch
          %574 = sbr.rel (%p572) target = $region92
        $region91: #{tpu_custom_call.1} parent=59 // pred_region
          %575 = dma.done %s568, 128
        $region92: #{tpu_custom_call.1} parent=59 // pred_fallthru
          _
        %s576 = sand.u32 %s47, 1
        %s577 = scalar_lea.sflag [#allocation3], %s576
        %s578 = sand.u32 %s47, 1
        %s579 = smul.addr %s578, 8
        %s580 = scalar_lea.vmem [#allocation2], %s579
        %p581 = pneg %p60
        %p582 = pneg %p57
        %s583 = sand.u32 %s39, 1
        %s584 = scalar_lea.sflag [#allocation6], %s583
        %s585 = sand.u32 %s73, 1
        %s586 = smul.addr %s585, 8
        %s587 = scalar_lea.vmem [#allocation5], %s586
        %p588 = pneg %p86
        %p589 = pneg %p83
        %s590 = sand.u32 %s39, 1
        %s591 = scalar_lea.sflag [#allocation6], %s590
        %s592 = sand.u32 %s99, 1
        %s593 = smul.addr %s592, 8
        %s594 = scalar_lea.vmem [#allocation7], %s593
        %p595 = pneg %p112
        %p596 = pneg %p109
        %s597 = sand.u32 %s39, 1
        %s598 = scalar_lea.sflag [#allocation9], %s597
        %s599 = sand.u32 %s125, 1
        %s600 = smul.addr %s599, 8
        %s601 = scalar_lea.vmem [#allocation8], %s600
        %p602 = pneg %p138
        %p603 = pneg %p135
        %s604 = sand.u32 %s39, 1
        %s605 = scalar_lea.sflag [#allocation9], %s604
        %s606 = sand.u32 %s151, 1
        %s607 = smul.addr %s606, 8
        %s608 = scalar_lea.vmem [#allocation10], %s607
        %p609 = pneg %p164
        %p610 = pneg %p161
        %p611 = scmp.lt.s32.totalorder %s39, 1
        %s612 = scalar_select %p611, %s39, 1
        %s613 = smul.addr %s612, 8
        %s614 = scalar_lea.vmem %s5, %s613
        %p615 = pneg %p190
        %p616 = pneg %p187
        %s617 = sand.u32 %s39, 1
        %s618 = scalar_lea.sflag [#allocation12], %s617
        %s619 = sand.u32 %s203, 1
        %s620 = smul.addr %s619, 8
        %s621 = scalar_lea.vmem [#allocation11], %s620
        %p622 = pneg %p216
        %p623 = pneg %p213
        %s624 = sand.u32 %s39, 1
        %s625 = scalar_lea.sflag [#allocation12], %s624
        %s626 = sand.u32 %s229, 1
        %s627 = smul.addr %s626, 8
        %s628 = scalar_lea.vmem [#allocation13], %s627
        %p629 = pneg %p242
        %p630 = pneg %p239
        %s631 = sand.u32 %s255, 1
        %s632 = scalar_lea.sflag [#allocation15], %s631
        %s633 = sand.u32 %s255, 1
        %s634 = smul.addr %s633, 8
        %s635 = scalar_lea.vmem [#allocation14], %s634
        %p636 = pneg %p268
        %p637 = pneg %p265
        %p638 = scmp.lt.s32.totalorder %s39, 1
        %s639 = scalar_select %p638, %s39, 1
        %s640 = smul.addr %s639, 8
        %s641 = scalar_lea.vmem %s9, %s640
        %p642 = pneg %p294
        %p643 = pneg %p291
        %p644 = pneg %p320
        %p645 = pneg %p317
        %s646 = sand.u32 %s307, 1
        %s647 = scalar_lea.sflag [#allocation4], %s646
        %s648 = sand.u32 %s307, 1
        %s649 = smul.addr %s648, 8
        %s650 = scalar_lea.vmem [#allocation16], %s649
        %p651 = scmp.lt.s32.totalorder %s39, 1
        %s652 = scalar_select %p651, %s39, 1
        %s653 = smul.addr %s652, 8
        %s654 = scalar_lea.vmem %s5, %s653
        %p655 = scmp.lt.s32.totalorder %s39, 1
        %s656 = scalar_select %p655, %s39, 1
        %s657 = smul.addr %s656, 8
        %s658 = scalar_lea.vmem %s9, %s657
        %v659 = vld [vmem:[%s508] sm:$0xff]
        %v660 = vadd.f32 %v659, 0.5
        %v661 = vsub.f32 %v659, 0.5
        %v662 = vld [vmem:[%s517] sm:$0xff]
        %v663 = vld [vmem:[%s544] sm:$0xff]
        %v664 = vmax.f32 %v663, 1e-09
        %v665 = vrcp.pop %v664
        %v666 = vmul.f32 0.70710677, %v665
        %v667 = vsub.f32 %v660, %v662
        %v668 = vmul.f32 %v667, %v666
        %v669 = vand.u32 2147483647, %v668
        %v670 = vmul.f32 %v669, 0.3275911
        %v671 = vadd.f32 %v670, 1.0
        %v672 = vrcp.pop %v671
        %v673 = vmul.f32 1.0, %v672
        %v674 = vmul.f32 %v673, 1.0614054
        %v675 = vadd.f32 %v674, -1.4531521
        %v676 = vmul.f32 %v673, %v675
        %v677 = vadd.f32 %v676, 1.4214138
        %v678 = vmul.f32 %v673, %v677
        %v679 = vadd.f32 %v678, -0.28449672
        %v680 = vmul.f32 %v673, %v679
        %v681 = vadd.f32 %v680, 0.2548296
        %v682 = vmul.f32 %v673, %v681
        %v683 = vmul.f32 %v669, %v669
        %v684 = vsub.f32 0.0, %v683
        %v685 = vmul.f32 %v684, 1.442695
        %v686 = vpow.pop %v685
        %v687 = vmul.f32 %v682, %v686
        %vm688 = vcmp.lt.f32.partialorder %v668, 0.0
        %v689 = vsub.f32 %v687, 1.0
        %v690 = vsub.f32 1.0, %v687
        %v691 = vsel %vm688, %v689, %v690
        %v692 = vsub.f32 %v661, %v662
        %v693 = vmul.f32 %v692, %v666
        %v694 = vand.u32 2147483647, %v693
        %v695 = vmul.f32 %v694, 0.3275911
        %v696 = vadd.f32 %v695, 1.0
        %v697 = vrcp.pop %v696
        %v698 = vmul.f32 1.0, %v697
        %v699 = vmul.f32 %v698, 1.0614054
        %v700 = vadd.f32 %v699, -1.4531521
        %v701 = vmul.f32 %v698, %v700
        %v702 = vadd.f32 %v701, 1.4214138
        %v703 = vmul.f32 %v698, %v702
        %v704 = vadd.f32 %v703, -0.28449672
        %v705 = vmul.f32 %v698, %v704
        %v706 = vadd.f32 %v705, 0.2548296
        %v707 = vmul.f32 %v698, %v706
        %v708 = vmul.f32 %v694, %v694
        %v709 = vsub.f32 0.0, %v708
        %v710 = vmul.f32 %v709, 1.442695
        %v711 = vpow.pop %v710
        %v712 = vmul.f32 %v707, %v711
        %vm713 = vcmp.lt.f32.partialorder %v693, 0.0
        %v714 = vsub.f32 %v712, 1.0
        %v715 = vsub.f32 1.0, %v712
        %v716 = vsel %vm713, %v714, %v715
        %v717 = vsub.f32 %v691, %v716
        %v718 = vld [vmem:[%s562] sm:$0xff]
        %v719 = vand.u32 2147483647, %v717
        %v720 = vmul.f32 %v718, %v719
        %v721 = vld [vmem:[%s526] sm:$0xff]
        %v722 = vld [vmem:[%s654] sm:$0xff]
        %v723 = vmax.f32 %v722, 1e-09
        %v724 = vrcp.pop %v723
        %v725 = vmul.f32 0.70710677, %v724
        %v726 = vsub.f32 %v660, %v721
        %v727 = vmul.f32 %v726, %v725
        %v728 = vand.u32 2147483647, %v727
        %v729 = vmul.f32 %v728, 0.3275911
        %v730 = vadd.f32 %v729, 1.0
        %v731 = vrcp.pop %v730
        %v732 = vmul.f32 1.0, %v731
        %v733 = vmul.f32 %v732, 1.0614054
        %v734 = vadd.f32 %v733, -1.4531521
        %v735 = vmul.f32 %v732, %v734
        %v736 = vadd.f32 %v735, 1.4214138
        %v737 = vmul.f32 %v732, %v736
        %v738 = vadd.f32 %v737, -0.28449672
        %v739 = vmul.f32 %v732, %v738
        %v740 = vadd.f32 %v739, 0.2548296
        %v741 = vmul.f32 %v732, %v740
        %v742 = vmul.f32 %v728, %v728
        %v743 = vsub.f32 0.0, %v742
        %v744 = vmul.f32 %v743, 1.442695
        %v745 = vpow.pop %v744
        %v746 = vmul.f32 %v741, %v745
        %vm747 = vcmp.lt.f32.partialorder %v727, 0.0
        %v748 = vsub.f32 %v746, 1.0
        %v749 = vsub.f32 1.0, %v746
        %v750 = vsel %vm747, %v748, %v749
        %v751 = vsub.f32 %v661, %v721
        %v752 = vmul.f32 %v751, %v725
        %v753 = vand.u32 2147483647, %v752
        %v754 = vmul.f32 %v753, 0.3275911
        %v755 = vadd.f32 %v754, 1.0
        %v756 = vrcp.pop %v755
        %v757 = vmul.f32 1.0, %v756
        %v758 = vmul.f32 %v757, 1.0614054
        %v759 = vadd.f32 %v758, -1.4531521
        %v760 = vmul.f32 %v757, %v759
        %v761 = vadd.f32 %v760, 1.4214138
        %v762 = vmul.f32 %v757, %v761
        %v763 = vadd.f32 %v762, -0.28449672
        %v764 = vmul.f32 %v757, %v763
        %v765 = vadd.f32 %v764, 0.2548296
        %v766 = vmul.f32 %v757, %v765
        %v767 = vmul.f32 %v753, %v753
        %v768 = vsub.f32 0.0, %v767
        %v769 = vmul.f32 %v768, 1.442695
        %v770 = vpow.pop %v769
        %v771 = vmul.f32 %v766, %v770
        %vm772 = vcmp.lt.f32.partialorder %v752, 0.0
        %v773 = vsub.f32 %v771, 1.0
        %v774 = vsub.f32 1.0, %v771
        %v775 = vsel %vm772, %v773, %v774
        %v776 = vsub.f32 %v750, %v775
        %v777 = vld [vmem:[%s571] sm:$0xff]
        %v778 = vand.u32 2147483647, %v776
        %v779 = vmul.f32 %v777, %v778
        %v780 = vadd.f32 %v720, %v779
        %v781 = vld [vmem:[%s535] sm:$0xff]
        %v782 = vld [vmem:[%s553] sm:$0xff]
        %v783 = vmax.f32 %v782, 1e-09
        %v784 = vrcp.pop %v783
        %v785 = vmul.f32 0.70710677, %v784
        %v786 = vsub.f32 %v660, %v781
        %v787 = vmul.f32 %v786, %v785
        %v788 = vand.u32 2147483647, %v787
        %v789 = vmul.f32 %v788, 0.3275911
        %v790 = vadd.f32 %v789, 1.0
        %v791 = vrcp.pop %v790
        %v792 = vmul.f32 1.0, %v791
        %v793 = vmul.f32 %v792, 1.0614054
        %v794 = vadd.f32 %v793, -1.4531521
        %v795 = vmul.f32 %v792, %v794
        %v796 = vadd.f32 %v795, 1.4214138
        %v797 = vmul.f32 %v792, %v796
        %v798 = vadd.f32 %v797, -0.28449672
        %v799 = vmul.f32 %v792, %v798
        %v800 = vadd.f32 %v799, 0.2548296
        %v801 = vmul.f32 %v792, %v800
        %v802 = vmul.f32 %v788, %v788
        %v803 = vsub.f32 0.0, %v802
        %v804 = vmul.f32 %v803, 1.442695
        %v805 = vpow.pop %v804
        %v806 = vmul.f32 %v801, %v805
        %vm807 = vcmp.lt.f32.partialorder %v787, 0.0
        %v808 = vsub.f32 %v806, 1.0
        %v809 = vsub.f32 1.0, %v806
        %v810 = vsel %vm807, %v808, %v809
        %v811 = vsub.f32 %v661, %v781
        %v812 = vmul.f32 %v811, %v785
        %v813 = vand.u32 2147483647, %v812
        %v814 = vmul.f32 %v813, 0.3275911
        %v815 = vadd.f32 %v814, 1.0
        %v816 = vrcp.pop %v815
        %v817 = vmul.f32 1.0, %v816
        %v818 = vmul.f32 %v817, 1.0614054
        %v819 = vadd.f32 %v818, -1.4531521
        %v820 = vmul.f32 %v817, %v819
        %v821 = vadd.f32 %v820, 1.4214138
        %v822 = vmul.f32 %v817, %v821
        %v823 = vadd.f32 %v822, -0.28449672
        %v824 = vmul.f32 %v817, %v823
        %v825 = vadd.f32 %v824, 0.2548296
        %v826 = vmul.f32 %v817, %v825
        %v827 = vmul.f32 %v813, %v813
        %v828 = vsub.f32 0.0, %v827
        %v829 = vmul.f32 %v828, 1.442695
        %v830 = vpow.pop %v829
        %v831 = vmul.f32 %v826, %v830
        %vm832 = vcmp.lt.f32.partialorder %v812, 0.0
        %v833 = vsub.f32 %v831, 1.0
        %v834 = vsub.f32 1.0, %v831
        %v835 = vsel %vm832, %v833, %v834
        %v836 = vsub.f32 %v810, %v835
        %v837 = vld [vmem:[%s658] sm:$0xff]
        %v838 = vand.u32 2147483647, %v836
        %v839 = vmul.f32 %v837, %v838
        %v840 = vadd.f32 %v780, %v839
        %v841 = vmul.f32 %v840, 0.5
        %v842 = vmax.f32 %v841, 1e-06
        %v843 = vlog2.pop %v842
        %v844 = vmul.f32 %v843, 0.6931472
        %v845 = vrcp.pop 0.6931472
        %v846 = vmul.f32 %v844, %v845
        %v847 = vsub.f32 0.0, %v846
        %848 = vst [vmem:[%s650] sm:$0xff] %v847
        %s849 = sand.u32 %s307, 1
        %s850 = scalar_lea.sflag [#allocation4], %s849
        %s851 = sand.u32 %s307, 1
        %s852 = smul.addr %s851, 8
        %s853 = scalar_lea.vmem [#allocation16], %s852
        // Predicated region
        $region93: #{tpu_custom_call.1} parent=59 // pred_check
          %p854 = pneg %p317
        $region94: #{tpu_custom_call.1} parent=59 // pred_check_branch
          %856 = sbr.rel (%p854) target = $region96
        $region95: #{tpu_custom_call.1} parent=59 // pred_region
          %s858 = ssub.s32 128, 128
          %859 = vsyncadd %s850, %s858
          %s860 = smul.addr %s39, 128
          %s861 = scalar_lea.hbm %s10, %s860
          %s863 = sshll.u32 %s853, 4
          %s864 = int_to_ptr.vmem [resolvable:$true] %s863
          %866 = dma.vmem_to_hbm [thread:$0]  %s864, 128, %s861, %s850
        $region96: #{tpu_custom_call.1} parent=59 // pred_fallthru
          _
      $region60: #{tpu_custom_call.1} parent=5 // pred_fallthru
        _
      %p867 = scmp.le.s32.totalorder 2, %s34
      // Predicated region
      $region97: #{tpu_custom_call.1} parent=5 // pred_check
        %p868 = pneg %p867
      $region98: #{tpu_custom_call.1} parent=5 // pred_check_branch
        %870 = sbr.rel (%p868) target = $region100
      $region99: #{tpu_custom_call.1} parent=5 // pred_region
        %s871 = ssub.s32 %s34, 2
        // Predicated region
        $region101: #{tpu_custom_call.1} parent=99 // pred_check
          %p872 = pneg %p323
        $region102: #{tpu_custom_call.1} parent=99 // pred_check_branch
          %874 = sbr.rel (%p872) target = $region104
        $region103: #{tpu_custom_call.1} parent=99 // pred_region
          %s875 = sand.u32 %s308, 1
          %s876 = scalar_lea.sflag [#allocation4], %s875
          %s877 = sand.u32 %s308, 1
          %s878 = smul.addr %s877, 8
          %s879 = scalar_lea.vmem [#allocation16], %s878
          %880 = dma.done %s876, 128
        $region104: #{tpu_custom_call.1} parent=99 // pred_fallthru
          _
      $region100: #{tpu_custom_call.1} parent=5 // pred_fallthru
        _
    $region6: #{tpu_custom_call.1} parent=1 // loop_footer
      %s38 = sadd.s32 1, %s34
    $region7: #{tpu_custom_call.1} parent=1 // loop_footer_branch
      %33 = sbr.rel target = $region3
    $region8: #{tpu_custom_call.1} parent=1 // loop_exit
      _
    %881 = vsyncpa [#allocation3], 1
    %s882 = scalar_lea.sflag [#allocation3], 1
    %883 = vsyncpa %s882, 1
    %884 = vsyncpa [#allocation6], 1
    %s885 = scalar_lea.sflag [#allocation6], 1
    %886 = vsyncpa %s885, 1
    %887 = vsyncpa [#allocation9], 1
    %s888 = scalar_lea.sflag [#allocation9], 1
    %889 = vsyncpa %s888, 1
    %890 = vsyncpa [#allocation12], 1
    %s891 = scalar_lea.sflag [#allocation12], 1
    %892 = vsyncpa %s891, 1
    %893 = vsyncpa [#allocation15], 1
    %s894 = scalar_lea.sflag [#allocation15], 1
    %895 = vsyncpa %s894, 1
    %896 = vsyncpa [#allocation4], 1
    %s897 = scalar_lea.sflag [#allocation4], 1
    %898 = vsyncpa %s897, 1

</llo_original>
